<compile_context>
chip_gen: v7x
topology: tpu7x:2x2x1
jax: 0.10.0
libtpu: 0.0.40
codegen_flags: <defaults>
</compile_context>

<pallas_src>
import functools
import math

import jax
import jax.numpy as jnp
from jax.experimental import pallas as pl
from jax.experimental.pallas import tpu as pltpu  # noqa: F401  (TPU backend)

_LANE = 128      # vreg lane width (pack width / output lane padding)
_PACK_ROW = 16   # bf16 sublane tile height; align packed segments to this


def _round_up(n, m):
    return (n + m - 1) // m * m


def _fused_mlp_kernel(x_ref, w1_ref, pack_ref, o_ref, *, segments):
    """Whole network in one kernel.

    x_ref    : (B, Din)      f32   (full-array block)
    w1_ref   : (Din, width)  bf16  (full-array block, unpadded)
    pack_ref : (R, 128)      bf16  packed [b1, W2, b2, ..., W_last, b_last]
    o_ref    : (B, 128)      f32   (lane-dense output, real cols = output_dim)
    segments : static tuple of (row_off, n_rows, n_cols) into pack_ref.
    """
    def seg(i):
        r0, nr, nc = segments[i]
        return pack_ref[r0:r0 + nr, :nc]          # static slice: no runtime cost

    # Layer 0: x @ W1 + b1, ReLU.  bf16 operands, f32 accumulation.
    x = x_ref[...].astype(jnp.bfloat16)
    h = jnp.dot(x, w1_ref[...], preferred_element_type=jnp.float32)
    h = h + seg(0).astype(jnp.float32)
    h = jnp.maximum(h, 0.0)

    # Remaining layers: ReLU after every layer except the last.
    n_rest = (len(segments) - 1) // 2
    for li in range(n_rest):
        w = seg(1 + 2 * li)
        b = seg(2 + 2 * li)
        h = jnp.dot(h.astype(jnp.bfloat16), w, preferred_element_type=jnp.float32)
        h = h + b.astype(jnp.float32)
        if li < n_rest - 1:
            h = jnp.maximum(h, 0.0)

    o_ref[...] = h


def init_mlp_params(key, input_shape, output_dim, width, depth):
    """Mirrors nn.Linear default init (U[-1/sqrt(fan_in), +1/sqrt(fan_in)]).
    Weights stored as (in_features, out_features)."""
    input_dim = int(math.prod(input_shape))
    dims = [input_dim] + [width] * depth + [output_dim]
    params = []
    for i in range(len(dims) - 1):
        fan_in, fan_out = dims[i], dims[i + 1]
        key, kw, kb = jax.random.split(key, 3)
        bound = 1.0 / math.sqrt(fan_in)
        w = jax.random.uniform(kw, (fan_in, fan_out), jnp.float32, -bound, bound)
        b = jax.random.uniform(kb, (fan_out,), jnp.float32, -bound, bound)
        params.append((w, b))
    return params


def pack_params(params, output_dim):
    """Prepare kernel operands (done once, reused every forward call).

    Returns:
      w1      : (Din, width) bf16, unpadded (full-array block in the kernel).
      packed  : (R, 128) bf16 holding [b1, W2, b2, ..., W_last(out-padded),
                b_last(out-padded)], each segment starting at a 16-row-aligned
                offset.
      segments: static tuple of (row_off, n_rows, n_cols) per segment.
      dout_pad: output lane padding (128) for the lane-dense store.
    """
    dout = params[-1][0].shape[1]
    assert dout == output_dim
    dout_pad = _round_up(dout, _LANE)

    w1 = params[0][0].astype(jnp.bfloat16)

    pieces = [params[0][1][None, :]]                  # b1: (1, width)
    for li in range(1, len(params)):
        w, b = params[li]
        fout = w.shape[1]
        if li == len(params) - 1 and fout != dout_pad:
            # Zero-pad the final layer's output features to 128 lanes (exact).
            w = jnp.zeros((w.shape[0], dout_pad), w.dtype).at[:, :fout].set(w)
            b = jnp.zeros((dout_pad,), b.dtype).at[:fout].set(b)
        pieces.append(w)
        pieces.append(b[None, :])

    segments = []
    row = 0
    for p in pieces:
        nr, nc = p.shape
        assert nc <= _LANE, "pack width exceeded; widen the packed array"
        segments.append((row, nr, nc))
        row = _round_up(row + nr, _PACK_ROW)
    total_rows = _round_up(row, _PACK_ROW)

    packed = jnp.zeros((total_rows, _LANE), jnp.bfloat16)
    for (r0, nr, nc), p in zip(segments, pieces):
        packed = packed.at[r0:r0 + nr, :nc].set(p.astype(jnp.bfloat16))

    return w1, packed, tuple(segments), dout_pad


def mlp_forward(x, w1, packed, *, segments, output_dim, dout_pad):
    """x: (B, C, H, W) NCHW -> (B, output_dim). Single fused pallas_call."""
    B = x.shape[0]
    xf = x.reshape(B, -1)                             # nn.Flatten (row-major)

    kernel = functools.partial(_fused_mlp_kernel, segments=segments)
    out_padded = pl.pallas_call(
        kernel,
        out_shape=jax.ShapeDtypeStruct((B, dout_pad), jnp.float32),
        in_specs=[
            pl.BlockSpec(xf.shape, lambda: (0, 0)),       # full-array blocks:
            pl.BlockSpec(w1.shape, lambda: (0, 0)),       # exempt from (8,128)
            pl.BlockSpec(packed.shape, lambda: (0, 0)),   # divisibility rule
        ],
        out_specs=pl.BlockSpec((B, dout_pad), lambda: (0, 0)),
    )(xf, w1, packed)
    return out_padded[:, :output_dim]


if __name__ == "__main__":
    key = jax.random.PRNGKey(0)

    # Module config: input_shape=(4,16,16) -> input_dim=1024, width=32,
    # depth=2, output_dim=8, batch=2.
    input_shape = (4, 16, 16)
    output_dim = 8
    width = 32
    depth = 2
    batch = 2

    key, kx, kp = jax.random.split(key, 3)
    x = jax.random.normal(kx, (batch,) + input_shape, jnp.float32)
    params = init_mlp_params(kp, input_shape, output_dim, width, depth)

    # Pack / quantize once; reuse for every forward call.
    w1_bf16, packed, segments, dout_pad = pack_params(params, output_dim)

    fwd = jax.jit(functools.partial(
        mlp_forward, segments=segments, output_dim=output_dim, dout_pad=dout_pad))
    out = fwd(x, w1_bf16, packed)
    jax.block_until_ready(out)

    # Plain-JAX reference with the same bf16 quantization points
    # (bf16 params, bf16 activations into each matmul, f32 accumulation).
    def q(a):
        return a.astype(jnp.bfloat16).astype(jnp.float32)

    h_ref = q(x.reshape(batch, -1))
    for i, (w, b) in enumerate(params):
        h_ref = h_ref @ q(w) + q(b)
        if i < len(params) - 1:
            h_ref = q(jnp.maximum(h_ref, 0.0))

    assert out.shape == (batch, output_dim)
    assert jnp.allclose(out, h_ref, atol=1e-3, rtol=1e-3), \
        float(jnp.max(jnp.abs(out - h_ref)))

    print("KERNEL_OK")
</pallas_src>

<mosaic_0001>
module attributes {stable_mosaic.version = 11 : i64} {
  func.func @_fused_mlp_kernel(%arg0: memref<2x1024xf32, #tpu.memory_space<vmem>>, %arg1: memref<1024x32xbf16, #tpu.memory_space<vmem>>, %arg2: memref<112x128xbf16, #tpu.memory_space<vmem>>, %arg3: memref<2x128xf32, #tpu.memory_space<vmem>>) attributes {dimension_semantics = [], scalar_prefetch = 0 : i64, scratch_operands = 0 : i64, tpu.core_type = #tpu.core_type<tc>} {
    %c0 = arith.constant 0 : index
    %c0_0 = arith.constant 0 : index
    %0 = vector.load %arg0[%c0, %c0_0] : memref<2x1024xf32, #tpu.memory_space<vmem>>, vector<2x1024xf32>
    %1 = arith.truncf %0 : vector<2x1024xf32> to vector<2x1024xbf16>
    %c0_1 = arith.constant 0 : index
    %c0_2 = arith.constant 0 : index
    %2 = vector.load %arg1[%c0_1, %c0_2] : memref<1024x32xbf16, #tpu.memory_space<vmem>>, vector<1024x32xbf16>
    %cst = arith.constant dense<0.000000e+00> : vector<2x32xf32>
    %3 = tpu.matmul %1, %2, %cst {dimension_numbers = #tpu.dot_dimension_numbers<[1], [0], [0], [1], [0, 0, 1, 1], [], []>} : vector<2x1024xbf16>, vector<1024x32xbf16>, vector<2x32xf32> -> vector<2x32xf32>
    %c0_3 = arith.constant 0 : index
    %c0_4 = arith.constant 0 : index
    %4 = vector.load %arg2[%c0_3, %c0_4] : memref<112x128xbf16, #tpu.memory_space<vmem>>, vector<1x32xbf16>
    %5 = arith.extf %4 : vector<1x32xbf16> to vector<1x32xf32>
    %6 = vector.broadcast %5 : vector<1x32xf32> to vector<2x32xf32>
    %7 = arith.addf %3, %6 : vector<2x32xf32>
    %cst_5 = arith.constant 0.000000e+00 : f32
    %8 = vector.broadcast %cst_5 : f32 to vector<2x32xf32>
    %9 = arith.maximumf %7, %8 : vector<2x32xf32>
    %c16 = arith.constant 16 : index
    %c0_6 = arith.constant 0 : index
    %10 = vector.load %arg2[%c16, %c0_6] : memref<112x128xbf16, #tpu.memory_space<vmem>>, vector<32x32xbf16>
    %c48 = arith.constant 48 : index
    %c0_7 = arith.constant 0 : index
    %11 = vector.load %arg2[%c48, %c0_7] : memref<112x128xbf16, #tpu.memory_space<vmem>>, vector<1x32xbf16>
    %12 = arith.truncf %9 : vector<2x32xf32> to vector<2x32xbf16>
    %cst_8 = arith.constant dense<0.000000e+00> : vector<2x32xf32>
    %13 = tpu.matmul %12, %10, %cst_8 {dimension_numbers = #tpu.dot_dimension_numbers<[1], [0], [0], [1], [0, 0, 1, 1], [], []>} : vector<2x32xbf16>, vector<32x32xbf16>, vector<2x32xf32> -> vector<2x32xf32>
    %14 = arith.extf %11 : vector<1x32xbf16> to vector<1x32xf32>
    %15 = vector.broadcast %14 : vector<1x32xf32> to vector<2x32xf32>
    %16 = arith.addf %13, %15 : vector<2x32xf32>
    %cst_9 = arith.constant 0.000000e+00 : f32
    %17 = vector.broadcast %cst_9 : f32 to vector<2x32xf32>
    %18 = arith.maximumf %16, %17 : vector<2x32xf32>
    %c64 = arith.constant 64 : index
    %c0_10 = arith.constant 0 : index
    %19 = vector.load %arg2[%c64, %c0_10] : memref<112x128xbf16, #tpu.memory_space<vmem>>, vector<32x128xbf16>
    %c96 = arith.constant 96 : index
    %c0_11 = arith.constant 0 : index
    %20 = vector.load %arg2[%c96, %c0_11] : memref<112x128xbf16, #tpu.memory_space<vmem>>, vector<1x128xbf16>
    %21 = arith.truncf %18 : vector<2x32xf32> to vector<2x32xbf16>
    %cst_12 = arith.constant dense<0.000000e+00> : vector<2x128xf32>
    %22 = tpu.matmul %21, %19, %cst_12 {dimension_numbers = #tpu.dot_dimension_numbers<[1], [0], [0], [1], [0, 0, 1, 1], [], []>} : vector<2x32xbf16>, vector<32x128xbf16>, vector<2x128xf32> -> vector<2x128xf32>
    %23 = arith.extf %20 : vector<1x128xbf16> to vector<1x128xf32>
    %24 = vector.broadcast %23 : vector<1x128xf32> to vector<2x128xf32>
    %25 = arith.addf %22, %24 : vector<2x128xf32>
    %c0_13 = arith.constant 0 : index
    %c0_14 = arith.constant 0 : index
    %26 = vector.load %arg3[%c0_13, %c0_14] : memref<2x128xf32, #tpu.memory_space<vmem>>, vector<2x128xf32>
    tpu.vector_store %arg3[%c0_13, %c0_14], %25 {strides = array<i32>} : memref<2x128xf32, #tpu.memory_space<vmem>>, vector<2x128xf32>,
    return
  }
}

</mosaic_0001>

<llo_original>
// kernel: mlp_forward.1
$region0: #{mlp_forward.1}
  #allocation0 [shape = 'u32[]', space=smem, size = 0x4, offset = 0x4, fixed_abs, tag = 'smem constant byte address 0x4 - core index']
  #allocation1 [shape = 'u32[144,128]{1,0:T(1,128)}', space=vmem, size = 0x12000, scoped, tag = 'internal scratch']
  %s0 = inlined_call_operand.vmem [shape: f32[2,1024], index: 0, kind: input, shape index: {}]
  %s1 = inlined_call_operand.vmem [shape: bf16[1024,32], index: 1, kind: input, shape index: {}]
  %s2 = inlined_call_operand.vmem [shape: bf16[112,128], index: 2, kind: input, shape index: {}]
  %s3 = inlined_call_operand.hbm [shape: f32[2,128], index: 3, kind: output, shape index: {}]
  %s4 = sld [smem:[#allocation0]]
  $region22: #{mlp_forward.1} parent=0
    _
  %s6 = ssub.s32 1, %s4
  %s7 = scalar_select 0, %s6, %s4
  $region1: #{mlp_forward.1} parent=0
    #allocation2 [shape = 'u8[1024]{0}', space=vmem, size = 0x400, scoped, tag = 'output window, operand 0, single buffered']
    #allocation3 [shape = 's32[1]{0}', space=sflag, size = 0x4, scoped, tag = 'scoped memory for mlp_forward.1']
    %8 = vsyncpa [#allocation3], 0
    // Predicated region
    $region2: #{mlp_forward.1} parent=1 // pred_check
      _
    $region3: #{mlp_forward.1} parent=1 // pred_check_branch
      %10 = sbr.rel (0) target = $region5
    $region4: #{mlp_forward.1} parent=1 // pred_region
      _
    $region5: #{mlp_forward.1} parent=1 // pred_fallthru
      _
    // Predicated region
    $region6: #{mlp_forward.1} parent=1 // pred_check
      _
    $region7: #{mlp_forward.1} parent=1 // pred_check_branch
      %12 = sbr.rel (0) target = $region9
    $region8: #{mlp_forward.1} parent=1 // pred_region
      _
    $region9: #{mlp_forward.1} parent=1 // pred_fallthru
      _
    // Predicated region
    $region10: #{mlp_forward.1} parent=1 // pred_check
      _
    $region11: #{mlp_forward.1} parent=1 // pred_check_branch
      %14 = sbr.rel (0) target = $region13
    $region12: #{mlp_forward.1} parent=1 // pred_region
      _
    $region13: #{mlp_forward.1} parent=1 // pred_fallthru
      _
    %v16 = vld [vmem:[%s0] sm:$0xff]
    %v17 = vld [vmem:[%s0 + $0x8] sm:$0xff]
    %v20 = vcombine.high %v16, %v16
    %v22 = vunpack.c.l.s4 1983009808
    %v23 = vunpack.c.0.s8 %v22
    %v24 = vlaneseq
    %v25 = vshrl.u32 %v24, 7
    %v26 = vsub.s32 %v23, %v25
    %v27 = vrot.slane %v16, %v26
    %v29 = vunpack.c.l.s4 1983009808
    %v30 = vunpack.c.0.s8 %v29
    %v31 = vlaneseq
    %v32 = vshrl.u32 %v31, 7
    %v33 = vsub.s32 %v30, %v32
    %v34 = vrot.slane %v20, %v33
    %v35 = vcombine.high %v27, %v27
    %v36 = vcombine.high %v34, %v34
    %v37 = vcombine.high %v17, %v17
    %v39 = vunpack.c.l.s4 1983009808
    %v40 = vunpack.c.0.s8 %v39
    %v41 = vlaneseq
    %v42 = vshrl.u32 %v41, 7
    %v43 = vsub.s32 %v40, %v42
    %v44 = vrot.slane %v17, %v43
    %v46 = vunpack.c.l.s4 1983009808
    %v47 = vunpack.c.0.s8 %v46
    %v48 = vlaneseq
    %v49 = vshrl.u32 %v48, 7
    %v50 = vsub.s32 %v47, %v49
    %v51 = vrot.slane %v37, %v50
    %v52 = vcombine.high %v44, %v44
    %v53 = vcombine.high %v51, %v51
    %v62 = vpack.c.bf16 %v27, %v27
    %v63 = vpack.c.bf16 %v35, %v35
    %v64 = vpack.c.bf16 %v34, %v34
    %v65 = vpack.c.bf16 %v36, %v36
    %v66 = vpack.c.bf16 %v44, %v44
    %v67 = vpack.c.bf16 %v52, %v52
    %v68 = vpack.c.bf16 %v51, %v51
    %v69 = vpack.c.bf16 %v53, %v53
    %v70 = vld [vmem:[%s1] sm:$0xf]
    %v71 = vld [vmem:[%s1 + $0x4] sm:$0xf]
    %v72 = vld [vmem:[%s1 + $0x8] sm:$0xf]
    %v73 = vld [vmem:[%s1 + $0xc] sm:$0xf]
    %v74 = vld [vmem:[%s1 + $0x10] sm:$0xf]
    %v75 = vld [vmem:[%s1 + $0x14] sm:$0xf]
    %v76 = vld [vmem:[%s1 + $0x18] sm:$0xf]
    %v77 = vld [vmem:[%s1 + $0x1c] sm:$0xf]
    %v78 = vld [vmem:[%s1 + $0x20] sm:$0xf]
    %v79 = vld [vmem:[%s1 + $0x24] sm:$0xf]
    %v80 = vld [vmem:[%s1 + $0x28] sm:$0xf]
    %v81 = vld [vmem:[%s1 + $0x2c] sm:$0xf]
    %v82 = vld [vmem:[%s1 + $0x30] sm:$0xf]
    %v83 = vld [vmem:[%s1 + $0x34] sm:$0xf]
    %v84 = vld [vmem:[%s1 + $0x38] sm:$0xf]
    %v85 = vld [vmem:[%s1 + $0x3c] sm:$0xf]
    %v86 = vld [vmem:[%s1 + $0x40] sm:$0xf]
    %v87 = vld [vmem:[%s1 + $0x44] sm:$0xf]
    %v88 = vld [vmem:[%s1 + $0x48] sm:$0xf]
    %v89 = vld [vmem:[%s1 + $0x4c] sm:$0xf]
    %v90 = vld [vmem:[%s1 + $0x50] sm:$0xf]
    %v91 = vld [vmem:[%s1 + $0x54] sm:$0xf]
    %v92 = vld [vmem:[%s1 + $0x58] sm:$0xf]
    %v93 = vld [vmem:[%s1 + $0x5c] sm:$0xf]
    %v94 = vld [vmem:[%s1 + $0x60] sm:$0xf]
    %v95 = vld [vmem:[%s1 + $0x64] sm:$0xf]
    %v96 = vld [vmem:[%s1 + $0x68] sm:$0xf]
    %v97 = vld [vmem:[%s1 + $0x6c] sm:$0xf]
    %v98 = vld [vmem:[%s1 + $0x70] sm:$0xf]
    %v99 = vld [vmem:[%s1 + $0x74] sm:$0xf]
    %v100 = vld [vmem:[%s1 + $0x78] sm:$0xf]
    %v101 = vld [vmem:[%s1 + $0x7c] sm:$0xf]
    %v102 = vld [vmem:[%s1 + $0x80] sm:$0xf]
    %v103 = vld [vmem:[%s1 + $0x84] sm:$0xf]
    %v104 = vld [vmem:[%s1 + $0x88] sm:$0xf]
    %v105 = vld [vmem:[%s1 + $0x8c] sm:$0xf]
    %v106 = vld [vmem:[%s1 + $0x90] sm:$0xf]
    %v107 = vld [vmem:[%s1 + $0x94] sm:$0xf]
    %v108 = vld [vmem:[%s1 + $0x98] sm:$0xf]
    %v109 = vld [vmem:[%s1 + $0x9c] sm:$0xf]
    %v110 = vld [vmem:[%s1 + $0xa0] sm:$0xf]
    %v111 = vld [vmem:[%s1 + $0xa4] sm:$0xf]
    %v112 = vld [vmem:[%s1 + $0xa8] sm:$0xf]
    %v113 = vld [vmem:[%s1 + $0xac] sm:$0xf]
    %v114 = vld [vmem:[%s1 + $0xb0] sm:$0xf]
    %v115 = vld [vmem:[%s1 + $0xb4] sm:$0xf]
    %v116 = vld [vmem:[%s1 + $0xb8] sm:$0xf]
    %v117 = vld [vmem:[%s1 + $0xbc] sm:$0xf]
    %v118 = vld [vmem:[%s1 + $0xc0] sm:$0xf]
    %v119 = vld [vmem:[%s1 + $0xc4] sm:$0xf]
    %v120 = vld [vmem:[%s1 + $0xc8] sm:$0xf]
    %v121 = vld [vmem:[%s1 + $0xcc] sm:$0xf]
    %v122 = vld [vmem:[%s1 + $0xd0] sm:$0xf]
    %v123 = vld [vmem:[%s1 + $0xd4] sm:$0xf]
    %v124 = vld [vmem:[%s1 + $0xd8] sm:$0xf]
    %v125 = vld [vmem:[%s1 + $0xdc] sm:$0xf]
    %v126 = vld [vmem:[%s1 + $0xe0] sm:$0xf]
    %v127 = vld [vmem:[%s1 + $0xe4] sm:$0xf]
    %v128 = vld [vmem:[%s1 + $0xe8] sm:$0xf]
    %v129 = vld [vmem:[%s1 + $0xec] sm:$0xf]
    %v130 = vld [vmem:[%s1 + $0xf0] sm:$0xf]
    %v131 = vld [vmem:[%s1 + $0xf4] sm:$0xf]
    %v132 = vld [vmem:[%s1 + $0xf8] sm:$0xf]
    %v133 = vld [vmem:[%s1 + $0xfc] sm:$0xf]
    %v134 = vld [vmem:[%s1 + $0x100] sm:$0xf]
    %v135 = vld [vmem:[%s1 + $0x104] sm:$0xf]
    %v136 = vld [vmem:[%s1 + $0x108] sm:$0xf]
    %v137 = vld [vmem:[%s1 + $0x10c] sm:$0xf]
    %v138 = vld [vmem:[%s1 + $0x110] sm:$0xf]
    %v139 = vld [vmem:[%s1 + $0x114] sm:$0xf]
    %v140 = vld [vmem:[%s1 + $0x118] sm:$0xf]
    %v141 = vld [vmem:[%s1 + $0x11c] sm:$0xf]
    %v142 = vld [vmem:[%s1 + $0x120] sm:$0xf]
    %v143 = vld [vmem:[%s1 + $0x124] sm:$0xf]
    %v144 = vld [vmem:[%s1 + $0x128] sm:$0xf]
    %v145 = vld [vmem:[%s1 + $0x12c] sm:$0xf]
    %v146 = vld [vmem:[%s1 + $0x130] sm:$0xf]
    %v147 = vld [vmem:[%s1 + $0x134] sm:$0xf]
    %v148 = vld [vmem:[%s1 + $0x138] sm:$0xf]
    %v149 = vld [vmem:[%s1 + $0x13c] sm:$0xf]
    %v150 = vld [vmem:[%s1 + $0x140] sm:$0xf]
    %v151 = vld [vmem:[%s1 + $0x144] sm:$0xf]
    %v152 = vld [vmem:[%s1 + $0x148] sm:$0xf]
    %v153 = vld [vmem:[%s1 + $0x14c] sm:$0xf]
    %v154 = vld [vmem:[%s1 + $0x150] sm:$0xf]
    %v155 = vld [vmem:[%s1 + $0x154] sm:$0xf]
    %v156 = vld [vmem:[%s1 + $0x158] sm:$0xf]
    %v157 = vld [vmem:[%s1 + $0x15c] sm:$0xf]
    %v158 = vld [vmem:[%s1 + $0x160] sm:$0xf]
    %v159 = vld [vmem:[%s1 + $0x164] sm:$0xf]
    %v160 = vld [vmem:[%s1 + $0x168] sm:$0xf]
    %v161 = vld [vmem:[%s1 + $0x16c] sm:$0xf]
    %v162 = vld [vmem:[%s1 + $0x170] sm:$0xf]
    %v163 = vld [vmem:[%s1 + $0x174] sm:$0xf]
    %v164 = vld [vmem:[%s1 + $0x178] sm:$0xf]
    %v165 = vld [vmem:[%s1 + $0x17c] sm:$0xf]
    %v166 = vld [vmem:[%s1 + $0x180] sm:$0xf]
    %v167 = vld [vmem:[%s1 + $0x184] sm:$0xf]
    %v168 = vld [vmem:[%s1 + $0x188] sm:$0xf]
    %v169 = vld [vmem:[%s1 + $0x18c] sm:$0xf]
    %v170 = vld [vmem:[%s1 + $0x190] sm:$0xf]
    %v171 = vld [vmem:[%s1 + $0x194] sm:$0xf]
    %v172 = vld [vmem:[%s1 + $0x198] sm:$0xf]
    %v173 = vld [vmem:[%s1 + $0x19c] sm:$0xf]
    %v174 = vld [vmem:[%s1 + $0x1a0] sm:$0xf]
    %v175 = vld [vmem:[%s1 + $0x1a4] sm:$0xf]
    %v176 = vld [vmem:[%s1 + $0x1a8] sm:$0xf]
    %v177 = vld [vmem:[%s1 + $0x1ac] sm:$0xf]
    %v178 = vld [vmem:[%s1 + $0x1b0] sm:$0xf]
    %v179 = vld [vmem:[%s1 + $0x1b4] sm:$0xf]
    %v180 = vld [vmem:[%s1 + $0x1b8] sm:$0xf]
    %v181 = vld [vmem:[%s1 + $0x1bc] sm:$0xf]
    %v182 = vld [vmem:[%s1 + $0x1c0] sm:$0xf]
    %v183 = vld [vmem:[%s1 + $0x1c4] sm:$0xf]
    %v184 = vld [vmem:[%s1 + $0x1c8] sm:$0xf]
    %v185 = vld [vmem:[%s1 + $0x1cc] sm:$0xf]
    %v186 = vld [vmem:[%s1 + $0x1d0] sm:$0xf]
    %v187 = vld [vmem:[%s1 + $0x1d4] sm:$0xf]
    %v188 = vld [vmem:[%s1 + $0x1d8] sm:$0xf]
    %v189 = vld [vmem:[%s1 + $0x1dc] sm:$0xf]
    %v190 = vld [vmem:[%s1 + $0x1e0] sm:$0xf]
    %v191 = vld [vmem:[%s1 + $0x1e4] sm:$0xf]
    %v192 = vld [vmem:[%s1 + $0x1e8] sm:$0xf]
    %v193 = vld [vmem:[%s1 + $0x1ec] sm:$0xf]
    %v194 = vld [vmem:[%s1 + $0x1f0] sm:$0xf]
    %v195 = vld [vmem:[%s1 + $0x1f4] sm:$0xf]
    %v196 = vld [vmem:[%s1 + $0x1f8] sm:$0xf]
    %v197 = vld [vmem:[%s1 + $0x1fc] sm:$0xf]
    %v198 = vld [vmem:[%s2] sm:$0x1]
    %v199 = vunpack.c.l.bf16 %v198
    %v200 = vlaneseq
    %v201 = vshrl.u32 %v200, 7
    %v202 = vsub.s32 0, %v201
    %v203 = vrot.slane %v199, %v202
    %v332 = vunpack.c.l.b16 %v70
    %v333 = vunpack.c.l.b16 %v71
    %v334 = vunpack.c.l.b16 %v72
    %v335 = vunpack.c.l.b16 %v73
    %v336 = vunpack.c.l.b16 %v74
    %v337 = vunpack.c.l.b16 %v75
    %v338 = vunpack.c.l.b16 %v76
    %v339 = vunpack.c.l.b16 %v77
    %v340 = vunpack.c.l.b16 %v78
    %v341 = vunpack.c.l.b16 %v79
    %v342 = vunpack.c.l.b16 %v80
    %v343 = vunpack.c.l.b16 %v81
    %v344 = vunpack.c.l.b16 %v82
    %v345 = vunpack.c.l.b16 %v83
    %v346 = vunpack.c.l.b16 %v84
    %v347 = vunpack.c.l.b16 %v85
    %v348 = vunpack.c.l.b16 %v86
    %v349 = vunpack.c.l.b16 %v87
    %v350 = vunpack.c.l.b16 %v88
    %v351 = vunpack.c.l.b16 %v89
    %v352 = vunpack.c.l.b16 %v90
    %v353 = vunpack.c.l.b16 %v91
    %v354 = vunpack.c.l.b16 %v92
    %v355 = vunpack.c.l.b16 %v93
    %v356 = vunpack.c.l.b16 %v94
    %v357 = vunpack.c.l.b16 %v95
    %v358 = vunpack.c.l.b16 %v96
    %v359 = vunpack.c.l.b16 %v97
    %v360 = vunpack.c.l.b16 %v98
    %v361 = vunpack.c.l.b16 %v99
    %v362 = vunpack.c.l.b16 %v100
    %v363 = vunpack.c.l.b16 %v101
    %v364 = vunpack.c.l.b16 %v102
    %v365 = vunpack.c.l.b16 %v103
    %v366 = vunpack.c.l.b16 %v104
    %v367 = vunpack.c.l.b16 %v105
    %v368 = vunpack.c.l.b16 %v106
    %v369 = vunpack.c.l.b16 %v107
    %v370 = vunpack.c.l.b16 %v108
    %v371 = vunpack.c.l.b16 %v109
    %v372 = vunpack.c.l.b16 %v110
    %v373 = vunpack.c.l.b16 %v111
    %v374 = vunpack.c.l.b16 %v112
    %v375 = vunpack.c.l.b16 %v113
    %v376 = vunpack.c.l.b16 %v114
    %v377 = vunpack.c.l.b16 %v115
    %v378 = vunpack.c.l.b16 %v116
    %v379 = vunpack.c.l.b16 %v117
    %v380 = vunpack.c.l.b16 %v118
    %v381 = vunpack.c.l.b16 %v119
    %v382 = vunpack.c.l.b16 %v120
    %v383 = vunpack.c.l.b16 %v121
    %v384 = vunpack.c.l.b16 %v122
    %v385 = vunpack.c.l.b16 %v123
    %v386 = vunpack.c.l.b16 %v124
    %v387 = vunpack.c.l.b16 %v125
    %v388 = vunpack.c.l.b16 %v126
    %v389 = vunpack.c.l.b16 %v127
    %v390 = vunpack.c.l.b16 %v128
    %v391 = vunpack.c.l.b16 %v129
    %v392 = vunpack.c.l.b16 %v130
    %v393 = vunpack.c.l.b16 %v131
    %v394 = vunpack.c.l.b16 %v132
    %v395 = vunpack.c.l.b16 %v133
    %v396 = vunpack.c.l.b16 %v134
    %v397 = vunpack.c.l.b16 %v135
    %v398 = vunpack.c.l.b16 %v136
    %v399 = vunpack.c.l.b16 %v137
    %v400 = vunpack.c.l.b16 %v138
    %v401 = vunpack.c.l.b16 %v139
    %v402 = vunpack.c.l.b16 %v140
    %v403 = vunpack.c.l.b16 %v141
    %v404 = vunpack.c.l.b16 %v142
    %v405 = vunpack.c.l.b16 %v143
    %v406 = vunpack.c.l.b16 %v144
    %v407 = vunpack.c.l.b16 %v145
    %v408 = vunpack.c.l.b16 %v146
    %v409 = vunpack.c.l.b16 %v147
    %v410 = vunpack.c.l.b16 %v148
    %v411 = vunpack.c.l.b16 %v149
    %v412 = vunpack.c.l.b16 %v150
    %v413 = vunpack.c.l.b16 %v151
    %v414 = vunpack.c.l.b16 %v152
    %v415 = vunpack.c.l.b16 %v153
    %v416 = vunpack.c.l.b16 %v154
    %v417 = vunpack.c.l.b16 %v155
    %v418 = vunpack.c.l.b16 %v156
    %v419 = vunpack.c.l.b16 %v157
    %v420 = vunpack.c.l.b16 %v158
    %v421 = vunpack.c.l.b16 %v159
    %v422 = vunpack.c.l.b16 %v160
    %v423 = vunpack.c.l.b16 %v161
    %v424 = vunpack.c.l.b16 %v162
    %v425 = vunpack.c.l.b16 %v163
    %v426 = vunpack.c.l.b16 %v164
    %v427 = vunpack.c.l.b16 %v165
    %v428 = vunpack.c.l.b16 %v166
    %v429 = vunpack.c.l.b16 %v167
    %v430 = vunpack.c.l.b16 %v168
    %v431 = vunpack.c.l.b16 %v169
    %v432 = vunpack.c.l.b16 %v170
    %v433 = vunpack.c.l.b16 %v171
    %v434 = vunpack.c.l.b16 %v172
    %v435 = vunpack.c.l.b16 %v173
    %v436 = vunpack.c.l.b16 %v174
    %v437 = vunpack.c.l.b16 %v175
    %v438 = vunpack.c.l.b16 %v176
    %v439 = vunpack.c.l.b16 %v177
    %v440 = vunpack.c.l.b16 %v178
    %v441 = vunpack.c.l.b16 %v179
    %v442 = vunpack.c.l.b16 %v180
    %v443 = vunpack.c.l.b16 %v181
    %v444 = vunpack.c.l.b16 %v182
    %v445 = vunpack.c.l.b16 %v183
    %v446 = vunpack.c.l.b16 %v184
    %v447 = vunpack.c.l.b16 %v185
    %v448 = vunpack.c.l.b16 %v186
    %v449 = vunpack.c.l.b16 %v187
    %v450 = vunpack.c.l.b16 %v188
    %v451 = vunpack.c.l.b16 %v189
    %v452 = vunpack.c.l.b16 %v190
    %v453 = vunpack.c.l.b16 %v191
    %v454 = vunpack.c.l.b16 %v192
    %v455 = vunpack.c.l.b16 %v193
    %v456 = vunpack.c.l.b16 %v194
    %v457 = vunpack.c.l.b16 %v195
    %v458 = vunpack.c.l.b16 %v196
    %v459 = vunpack.c.l.b16 %v197
    %v460 = vpack.c.b16 %v333, %v332
    %v461 = vpack.c.b16 %v335, %v334
    %v462 = vpack.c.b16 %v337, %v336
    %v463 = vpack.c.b16 %v339, %v338
    %v464 = vpack.c.b16 %v341, %v340
    %v465 = vpack.c.b16 %v343, %v342
    %v466 = vpack.c.b16 %v345, %v344
    %v467 = vpack.c.b16 %v347, %v346
    %v468 = vpack.c.b16 %v349, %v348
    %v469 = vpack.c.b16 %v351, %v350
    %v470 = vpack.c.b16 %v353, %v352
    %v471 = vpack.c.b16 %v355, %v354
    %v472 = vpack.c.b16 %v357, %v356
    %v473 = vpack.c.b16 %v359, %v358
    %v474 = vpack.c.b16 %v361, %v360
    %v475 = vpack.c.b16 %v363, %v362
    %v476 = vpack.c.b16 %v365, %v364
    %v477 = vpack.c.b16 %v367, %v366
    %v478 = vpack.c.b16 %v369, %v368
    %v479 = vpack.c.b16 %v371, %v370
    %v480 = vpack.c.b16 %v373, %v372
    %v481 = vpack.c.b16 %v375, %v374
    %v482 = vpack.c.b16 %v377, %v376
    %v483 = vpack.c.b16 %v379, %v378
    %v484 = vpack.c.b16 %v381, %v380
    %v485 = vpack.c.b16 %v383, %v382
    %v486 = vpack.c.b16 %v385, %v384
    %v487 = vpack.c.b16 %v387, %v386
    %v488 = vpack.c.b16 %v389, %v388
    %v489 = vpack.c.b16 %v391, %v390
    %v490 = vpack.c.b16 %v393, %v392
    %v491 = vpack.c.b16 %v395, %v394
    %v492 = vpack.c.b16 %v397, %v396
    %v493 = vpack.c.b16 %v399, %v398
    %v494 = vpack.c.b16 %v401, %v400
    %v495 = vpack.c.b16 %v403, %v402
    %v496 = vpack.c.b16 %v405, %v404
    %v497 = vpack.c.b16 %v407, %v406
    %v498 = vpack.c.b16 %v409, %v408
    %v499 = vpack.c.b16 %v411, %v410
    %v500 = vpack.c.b16 %v413, %v412
    %v501 = vpack.c.b16 %v415, %v414
    %v502 = vpack.c.b16 %v417, %v416
    %v503 = vpack.c.b16 %v419, %v418
    %v504 = vpack.c.b16 %v421, %v420
    %v505 = vpack.c.b16 %v423, %v422
    %v506 = vpack.c.b16 %v425, %v424
    %v507 = vpack.c.b16 %v427, %v426
    %v508 = vpack.c.b16 %v429, %v428
    %v509 = vpack.c.b16 %v431, %v430
    %v510 = vpack.c.b16 %v433, %v432
    %v511 = vpack.c.b16 %v435, %v434
    %v512 = vpack.c.b16 %v437, %v436
    %v513 = vpack.c.b16 %v439, %v438
    %v514 = vpack.c.b16 %v441, %v440
    %v515 = vpack.c.b16 %v443, %v442
    %v516 = vpack.c.b16 %v445, %v444
    %v517 = vpack.c.b16 %v447, %v446
    %v518 = vpack.c.b16 %v449, %v448
    %v519 = vpack.c.b16 %v451, %v450
    %v520 = vpack.c.b16 %v453, %v452
    %v521 = vpack.c.b16 %v455, %v454
    %v522 = vpack.c.b16 %v457, %v456
    %v523 = vpack.c.b16 %v459, %v458
    %588 = vmatprep.subr.bf16.mxu0 0
    %589 = vmatpush1.bf16.msra.mxu0 %v460
    %590 = vmatprep.subr.bf16.mxu0 0
    %591 = vmatpush1.bf16.msra.mxu0 %v461
    %592 = vmatprep.subr.bf16.mxu0 0
    %593 = vmatpush1.bf16.msra.mxu0 %v462
    %594 = vmatprep.subr.bf16.mxu0 0
    %595 = vmatpush1.bf16.msra.mxu0 %v463
    %596 = vmatprep.subr.bf16.mxu0 0
    %597 = vmatpush1.bf16.msra.mxu0 %v464
    %598 = vmatprep.subr.bf16.mxu0 0
    %599 = vmatpush1.bf16.msra.mxu0 %v465
    %600 = vmatprep.subr.bf16.mxu0 0
    %601 = vmatpush1.bf16.msra.mxu0 %v466
    %602 = vmatprep.subr.bf16.mxu0 0
    %603 = vmatpush1.bf16.msra.mxu0 %v467
    %604 = vmatprep.subr.bf16.mxu0 0
    %605 = vmatpush1.bf16.msra.mxu0 %v468
    %606 = vmatprep.subr.bf16.mxu0 0
    %607 = vmatpush1.bf16.msra.mxu0 %v469
    %608 = vmatprep.subr.bf16.mxu0 0
    %609 = vmatpush1.bf16.msra.mxu0 %v470
    %610 = vmatprep.subr.bf16.mxu0 0
    %611 = vmatpush1.bf16.msra.mxu0 %v471
    %612 = vmatprep.subr.bf16.mxu0 0
    %613 = vmatpush1.bf16.msra.mxu0 %v472
    %614 = vmatprep.subr.bf16.mxu0 0
    %615 = vmatpush1.bf16.msra.mxu0 %v473
    %616 = vmatprep.subr.bf16.mxu0 0
    %617 = vmatpush1.bf16.msra.mxu0 %v474
    %618 = vmatprep.subr.bf16.mxu0 0
    %619 = vmatpush1.bf16.msra.mxu0 %v475
    %620 = vmatprep.mubr.bf16.mxu0 %v63
    %621 = vmatmul.mubr.bf16.gmra.mrb[0].mxu0 %v62
    %v622 = vpop.f32.mrb[0].mxu0
    %v623 = vadd.f32 %v203, %v622
    %v624 = vpop.f32.mrb[0].mxu0
    %v625 = vpop.f32.mrb[0].mxu0
    %v626 = vpop.f32.mrb[0].mxu0
    %627 = vdwg.mxu0
    %628 = vmatprep.subr.bf16.mxu0 0
    %629 = vmatpush1.bf16.msra.mxu0 %v476
    %630 = vmatprep.subr.bf16.mxu0 0
    %631 = vmatpush1.bf16.msra.mxu0 %v477
    %632 = vmatprep.subr.bf16.mxu0 0
    %633 = vmatpush1.bf16.msra.mxu0 %v478
    %634 = vmatprep.subr.bf16.mxu0 0
    %635 = vmatpush1.bf16.msra.mxu0 %v479
    %636 = vmatprep.subr.bf16.mxu0 0
    %637 = vmatpush1.bf16.msra.mxu0 %v480
    %638 = vmatprep.subr.bf16.mxu0 0
    %639 = vmatpush1.bf16.msra.mxu0 %v481
    %640 = vmatprep.subr.bf16.mxu0 0
    %641 = vmatpush1.bf16.msra.mxu0 %v482
    %642 = vmatprep.subr.bf16.mxu0 0
    %643 = vmatpush1.bf16.msra.mxu0 %v483
    %644 = vmatprep.subr.bf16.mxu0 0
    %645 = vmatpush1.bf16.msra.mxu0 %v484
    %646 = vmatprep.subr.bf16.mxu0 0
    %647 = vmatpush1.bf16.msra.mxu0 %v485
    %648 = vmatprep.subr.bf16.mxu0 0
    %649 = vmatpush1.bf16.msra.mxu0 %v486
    %650 = vmatprep.subr.bf16.mxu0 0
    %651 = vmatpush1.bf16.msra.mxu0 %v487
    %652 = vmatprep.subr.bf16.mxu0 0
    %653 = vmatpush1.bf16.msra.mxu0 %v488
    %654 = vmatprep.subr.bf16.mxu0 0
    %655 = vmatpush1.bf16.msra.mxu0 %v489
    %656 = vmatprep.subr.bf16.mxu0 0
    %657 = vmatpush1.bf16.msra.mxu0 %v490
    %658 = vmatprep.subr.bf16.mxu0 0
    %659 = vmatpush1.bf16.msra.mxu0 %v491
    %660 = vmatprep.mubr.bf16.mxu0 %v65
    %661 = vmatmul.mubr.bf16.gmra.mrb[0].mxu0 %v64
    %v662 = vpop.f32.mrb[0].mxu0
    %v663 = vadd.f32 %v623, %v662
    %v664 = vpop.f32.mrb[0].mxu0
    %v665 = vpop.f32.mrb[0].mxu0
    %v666 = vpop.f32.mrb[0].mxu0
    %667 = vdwg.mxu0
    %668 = vmatprep.subr.bf16.mxu0 0
    %669 = vmatpush1.bf16.msra.mxu0 %v492
    %670 = vmatprep.subr.bf16.mxu0 0
    %671 = vmatpush1.bf16.msra.mxu0 %v493
    %672 = vmatprep.subr.bf16.mxu0 0
    %673 = vmatpush1.bf16.msra.mxu0 %v494
    %674 = vmatprep.subr.bf16.mxu0 0
    %675 = vmatpush1.bf16.msra.mxu0 %v495
    %676 = vmatprep.subr.bf16.mxu0 0
    %677 = vmatpush1.bf16.msra.mxu0 %v496
    %678 = vmatprep.subr.bf16.mxu0 0
    %679 = vmatpush1.bf16.msra.mxu0 %v497
    %680 = vmatprep.subr.bf16.mxu0 0
    %681 = vmatpush1.bf16.msra.mxu0 %v498
    %682 = vmatprep.subr.bf16.mxu0 0
    %683 = vmatpush1.bf16.msra.mxu0 %v499
    %684 = vmatprep.subr.bf16.mxu0 0
    %685 = vmatpush1.bf16.msra.mxu0 %v500
    %686 = vmatprep.subr.bf16.mxu0 0
    %687 = vmatpush1.bf16.msra.mxu0 %v501
    %688 = vmatprep.subr.bf16.mxu0 0
    %689 = vmatpush1.bf16.msra.mxu0 %v502
    %690 = vmatprep.subr.bf16.mxu0 0
    %691 = vmatpush1.bf16.msra.mxu0 %v503
    %692 = vmatprep.subr.bf16.mxu0 0
    %693 = vmatpush1.bf16.msra.mxu0 %v504
    %694 = vmatprep.subr.bf16.mxu0 0
    %695 = vmatpush1.bf16.msra.mxu0 %v505
    %696 = vmatprep.subr.bf16.mxu0 0
    %697 = vmatpush1.bf16.msra.mxu0 %v506
    %698 = vmatprep.subr.bf16.mxu0 0
    %699 = vmatpush1.bf16.msra.mxu0 %v507
    %700 = vmatprep.mubr.bf16.mxu0 %v67
    %701 = vmatmul.mubr.bf16.gmra.mrb[0].mxu0 %v66
    %v702 = vpop.f32.mrb[0].mxu0
    %v703 = vadd.f32 %v663, %v702
    %v704 = vpop.f32.mrb[0].mxu0
    %v705 = vpop.f32.mrb[0].mxu0
    %v706 = vpop.f32.mrb[0].mxu0
    %707 = vdwg.mxu0
    %708 = vmatprep.subr.bf16.mxu0 0
    %709 = vmatpush1.bf16.msra.mxu0 %v508
    %710 = vmatprep.subr.bf16.mxu0 0
    %711 = vmatpush1.bf16.msra.mxu0 %v509
    %712 = vmatprep.subr.bf16.mxu0 0
    %713 = vmatpush1.bf16.msra.mxu0 %v510
    %714 = vmatprep.subr.bf16.mxu0 0
    %715 = vmatpush1.bf16.msra.mxu0 %v511
    %716 = vmatprep.subr.bf16.mxu0 0
    %717 = vmatpush1.bf16.msra.mxu0 %v512
    %718 = vmatprep.subr.bf16.mxu0 0
    %719 = vmatpush1.bf16.msra.mxu0 %v513
    %720 = vmatprep.subr.bf16.mxu0 0
    %721 = vmatpush1.bf16.msra.mxu0 %v514
    %722 = vmatprep.subr.bf16.mxu0 0
    %723 = vmatpush1.bf16.msra.mxu0 %v515
    %724 = vmatprep.subr.bf16.mxu0 0
    %725 = vmatpush1.bf16.msra.mxu0 %v516
    %726 = vmatprep.subr.bf16.mxu0 0
    %727 = vmatpush1.bf16.msra.mxu0 %v517
    %728 = vmatprep.subr.bf16.mxu0 0
    %729 = vmatpush1.bf16.msra.mxu0 %v518
    %730 = vmatprep.subr.bf16.mxu0 0
    %731 = vmatpush1.bf16.msra.mxu0 %v519
    %732 = vmatprep.subr.bf16.mxu0 0
    %733 = vmatpush1.bf16.msra.mxu0 %v520
    %734 = vmatprep.subr.bf16.mxu0 0
    %735 = vmatpush1.bf16.msra.mxu0 %v521
    %736 = vmatprep.subr.bf16.mxu0 0
    %737 = vmatpush1.bf16.msra.mxu0 %v522
    %738 = vmatprep.subr.bf16.mxu0 0
    %739 = vmatpush1.bf16.msra.mxu0 %v523
    %740 = vmatprep.mubr.bf16.mxu0 %v69
    %741 = vmatmul.mubr.bf16.gmra.mrb[0].mxu0 %v68
    %v742 = vpop.f32.mrb[0].mxu0
    %v743 = vadd.f32 %v703, %v742
    %v744 = vpop.f32.mrb[0].mxu0
    %v745 = vpop.f32.mrb[0].mxu0
    %v746 = vpop.f32.mrb[0].mxu0
    %747 = vdwg.mxu0
    %v748 = vmax.f32 %v743, 0.0
    %v749 = vld [vmem:[%s2 + $0x8] sm:$0xf]
    %v750 = vld [vmem:[%s2 + $0xc] sm:$0xf]
    %v751 = vld [vmem:[%s2 + $0x10] sm:$0xf]
    %v752 = vld [vmem:[%s2 + $0x14] sm:$0xf]
    %v753 = vld [vmem:[%s2 + $0x18] sm:$0x1]
    %v754 = vpack.c.bf16 %v748, %v748
    %v755 = vunpack.c.l.bf16 %v753
    %v756 = vlaneseq
    %v757 = vshrl.u32 %v756, 7
    %v758 = vsub.s32 0, %v757
    %v759 = vrot.slane %v755, %v758
    %v764 = vunpack.c.l.b16 %v749
    %v765 = vunpack.c.l.b16 %v750
    %v766 = vunpack.c.l.b16 %v751
    %v767 = vunpack.c.l.b16 %v752
    %v768 = vpack.c.b16 %v765, %v764
    %v769 = vpack.c.b16 %v767, %v766
    %vm772 = vcmask 261120
    %v774 = vsel %vm772, %v754, 0
    %776 = vmatprep.subr.bf16.mxu0 0
    %777 = vmatpush1.bf16.msra.mxu0 %v768
    %778 = vmatprep.subr.bf16.mxu0 0
    %779 = vmatpush1.bf16.msra.mxu0 %v769
    %780 = vmatprep.subr.bf16.mxu0 0
    %781 = vmatpush1.bf16.msra.mxu0 0
    %782 = vmatprep.subr.bf16.mxu0 0
    %783 = vmatpush1.bf16.msra.mxu0 0
    %784 = vmatprep.subr.bf16.mxu0 0
    %785 = vmatpush1.bf16.msra.mxu0 0
    %786 = vmatprep.subr.bf16.mxu0 0
    %787 = vmatpush1.bf16.msra.mxu0 0
    %788 = vmatprep.subr.bf16.mxu0 0
    %789 = vmatpush1.bf16.msra.mxu0 0
    %790 = vmatprep.subr.bf16.mxu0 0
    %791 = vmatpush1.bf16.msra.mxu0 0
    %792 = vmatprep.subr.bf16.mxu0 0
    %793 = vmatpush1.bf16.msra.mxu0 0
    %794 = vmatprep.subr.bf16.mxu0 0
    %795 = vmatpush1.bf16.msra.mxu0 0
    %796 = vmatprep.subr.bf16.mxu0 0
    %797 = vmatpush1.bf16.msra.mxu0 0
    %798 = vmatprep.subr.bf16.mxu0 0
    %799 = vmatpush1.bf16.msra.mxu0 0
    %800 = vmatprep.subr.bf16.mxu0 0
    %801 = vmatpush1.bf16.msra.mxu0 0
    %802 = vmatprep.subr.bf16.mxu0 0
    %803 = vmatpush1.bf16.msra.mxu0 0
    %804 = vmatprep.subr.bf16.mxu0 0
    %805 = vmatpush1.bf16.msra.mxu0 0
    %806 = vmatprep.subr.bf16.mxu0 0
    %807 = vmatpush1.bf16.msra.mxu0 0
    %808 = vmatprep.mubr.bf16.mxu0 0
    %809 = vmatmul.mubr.bf16.gmra.mrb[0].mxu0 %v774
    %v810 = vpop.f32.mrb[0].mxu0
    %v811 = vadd.f32 %v759, %v810
    %v812 = vpop.f32.mrb[0].mxu0
    %v813 = vpop.f32.mrb[0].mxu0
    %v814 = vpop.f32.mrb[0].mxu0
    %815 = vdwg.mxu0
    %v816 = vmax.f32 %v811, 0.0
    %v817 = vld [vmem:[%s2 + $0x20] sm:$0xf]
    %v818 = vld [vmem:[%s2 + $0x24] sm:$0xf]
    %v819 = vld [vmem:[%s2 + $0x28] sm:$0xf]
    %v820 = vld [vmem:[%s2 + $0x2c] sm:$0xf]
    %v821 = vld [vmem:[%s2 + $0x30] sm:$0x1]
    %v822 = vpack.c.bf16 %v816, %v816
    %v823 = vunpack.c.l.bf16 %v821
    %v824 = vlaneseq
    %v825 = vshrl.u32 %v824, 7
    %v826 = vsub.s32 0, %v825
    %v827 = vrot.slane %v823, %v826
    %v832 = vunpack.c.l.b16 %v817
    %v833 = vunpack.c.l.b16 %v818
    %v834 = vunpack.c.l.b16 %v819
    %v835 = vunpack.c.l.b16 %v820
    %v836 = vpack.c.b16 %v833, %v832
    %v837 = vpack.c.b16 %v835, %v834
    %v841 = vsel %vm772, %v822, 0
    %843 = vmatprep.subr.bf16.mxu0 0
    %844 = vmatpush1.bf16.msra.mxu0 %v836
    %845 = vmatprep.subr.bf16.mxu0 0
    %846 = vmatpush1.bf16.msra.mxu0 %v837
    %847 = vmatprep.subr.bf16.mxu0 0
    %848 = vmatpush1.bf16.msra.mxu0 0
    %849 = vmatprep.subr.bf16.mxu0 0
    %850 = vmatpush1.bf16.msra.mxu0 0
    %851 = vmatprep.subr.bf16.mxu0 0
    %852 = vmatpush1.bf16.msra.mxu0 0
    %853 = vmatprep.subr.bf16.mxu0 0
    %854 = vmatpush1.bf16.msra.mxu0 0
    %855 = vmatprep.subr.bf16.mxu0 0
    %856 = vmatpush1.bf16.msra.mxu0 0
    %857 = vmatprep.subr.bf16.mxu0 0
    %858 = vmatpush1.bf16.msra.mxu0 0
    %859 = vmatprep.subr.bf16.mxu0 0
    %860 = vmatpush1.bf16.msra.mxu0 0
    %861 = vmatprep.subr.bf16.mxu0 0
    %862 = vmatpush1.bf16.msra.mxu0 0
    %863 = vmatprep.subr.bf16.mxu0 0
    %864 = vmatpush1.bf16.msra.mxu0 0
    %865 = vmatprep.subr.bf16.mxu0 0
    %866 = vmatpush1.bf16.msra.mxu0 0
    %867 = vmatprep.subr.bf16.mxu0 0
    %868 = vmatpush1.bf16.msra.mxu0 0
    %869 = vmatprep.subr.bf16.mxu0 0
    %870 = vmatpush1.bf16.msra.mxu0 0
    %871 = vmatprep.subr.bf16.mxu0 0
    %872 = vmatpush1.bf16.msra.mxu0 0
    %873 = vmatprep.subr.bf16.mxu0 0
    %874 = vmatpush1.bf16.msra.mxu0 0
    %875 = vmatprep.mubr.bf16.mxu0 0
    %876 = vmatmul.mubr.bf16.gmra.mrb[0].mxu0 %v841
    %v877 = vpop.f32.mrb[0].mxu0
    %v878 = vadd.f32 %v827, %v877
    %v879 = vpop.f32.mrb[0].mxu0
    %v880 = vpop.f32.mrb[0].mxu0
    %v881 = vpop.f32.mrb[0].mxu0
    %882 = vdwg.mxu0
    %883 = vst [vmem:[#allocation2] sm:$0x3] %v878
    // Predicated region
    $region14: #{mlp_forward.1} parent=1 // pred_check
      _
    $region15: #{mlp_forward.1} parent=1 // pred_check_branch
      %885 = sbr.rel (0) target = $region17
    $region16: #{mlp_forward.1} parent=1 // pred_region
      %s887 = ssub.s32 32, 32
      %888 = vsyncadd [#allocation3], %s887
      %s890 = sshll.u32 [#allocation2], 4
      %s891 = int_to_ptr.vmem [resolvable:$true] %s890
      %893 = dma.vmem_to_hbm [thread:$0]  %s891, 32, %s3, [#allocation3]
    $region17: #{mlp_forward.1} parent=1 // pred_fallthru
      _
    // Predicated region
    $region18: #{mlp_forward.1} parent=1 // pred_check
      _
    $region19: #{mlp_forward.1} parent=1 // pred_check_branch
      %895 = sbr.rel (0) target = $region21
    $region20: #{mlp_forward.1} parent=1 // pred_region
      %896 = dma.done [#allocation3], 32
    $region21: #{mlp_forward.1} parent=1 // pred_fallthru
      _
    %897 = vsyncpa [#allocation3], 1

</llo_original>
